<compile_context>
chip_gen: v5e
topology: v5e:2x2
jax: 0.10.0
libtpu: 0.0.40
codegen_flags: <defaults>
</compile_context>

<pallas_src>
import jax
import jax.numpy as jnp
from jax import lax
from jax.experimental import pallas as pl
from jax.experimental.pallas import tpu as pltpu


def os_nand_kernel(x_ref, mask_ref, o_ref):
    x = x_ref[...]          # (tb, X)        bf16, values in {0, 1}
    m = mask_ref[...]       # (2*Y_pad, X)   bf16 one-hot rows (zero-padded rows are all-zero)

    # x @ m.T without materializing the transpose: contract on the shared last dim.
    y2 = lax.dot_general(
        x, m,
        dimension_numbers=(((1,), (1,)), ((), ())),
        preferred_element_type=jnp.float32,
    )                        # (tb, 2*Y_pad), exact fp32 {0,1} values

    y_pad = y2.shape[1] // 2
    o_ref[...] = y2[:, :y_pad] * y2[:, y_pad:]   # binary AND of the two selections


def _hard_mask_rows(w, dtype):
    """First-occurrence argmax one-hot along dim 1 (== argmax(softmax(w)) of the torch module)."""
    idx = jnp.argmax(w, axis=1)
    return jax.nn.one_hot(idx, w.shape[1], dtype=dtype)


def os_nand(x, w_a, w_b, *, block_b=256):
    """Forward of OS_Nand (inference path). x: (B, X) binary; w_a/w_b: (Y, X) selector weights."""
    B, X = x.shape
    Y = w_a.shape[0]

    # Lane-dense output: pad Y up to a multiple of 128 (padded rows select nothing -> zeros).
    Y_pad = pl.cdiv(Y, 128) * 128

    # Hoisted, weights-only mask computation (tiny; done once, not per grid step).
    mask = jnp.zeros((2 * Y_pad, X), jnp.bfloat16)
    mask = mask.at[:Y, :].set(_hard_mask_rows(w_a, jnp.bfloat16))
    mask = mask.at[Y_pad:Y_pad + Y, :].set(_hard_mask_rows(w_b, jnp.bfloat16))

    # Batch tile: multiple of 8 sublanes, capped at block_b; pad the batch to a whole number of tiles.
    tb = min(block_b, pl.cdiv(B, 8) * 8)
    B_pad = pl.cdiv(B, tb) * tb
    x_p = x if B_pad == B else jnp.pad(x, ((0, B_pad - B), (0, 0)))
    x_bf = x_p.astype(jnp.bfloat16)   # exact for {0,1}; halves HBM->VMEM traffic

    grid = (B_pad // tb,)
    out = pl.pallas_call(
        os_nand_kernel,
        out_shape=jax.ShapeDtypeStruct((B_pad, Y_pad), jnp.float32),
        grid_spec=pltpu.PrefetchScalarGridSpec(
            num_scalar_prefetch=0,
            grid=grid,
            in_specs=[
                pl.BlockSpec((tb, X), lambda b: (b, 0)),            # x batch tile
                pl.BlockSpec((2 * Y_pad, X), lambda b: (0, 0)),     # fused masks, resident
            ],
            out_specs=pl.BlockSpec((tb, Y_pad), lambda b: (b, 0)),
        ),
        compiler_params=pltpu.CompilerParams(
            dimension_semantics=("parallel",),   # shard batch tiles across v7x's 2 TCs
        ),
    )(x_bf, mask)

    return out[:B, :Y]


def xavier_uniform(key, out_features, in_features):
    bound = jnp.sqrt(6.0 / (in_features + out_features))
    return jax.random.uniform(
        key, (out_features, in_features), minval=-bound, maxval=bound, dtype=jnp.float32
    )


def check_binary(t, name):
    ok = bool(jnp.all((t == 0) | (t == 1)))
    assert ok, f"{name} contains values other than 0 or 1!"


if __name__ == "__main__":
    # OS_Nand(x=IN_FEATURES, y=OUT_FEATURES); input is binary {0,1}
    B, IN_F, OUT_F = 8, 32, 16

    key = jax.random.PRNGKey(0)
    k_x, k_a, k_b = jax.random.split(key, 3)

    x = jax.random.bernoulli(k_x, p=0.5, shape=(B, IN_F)).astype(jnp.float32)
    w_a = xavier_uniform(k_a, OUT_F, IN_F)   # Op_Selector a: Linear(IN_F, OUT_F).weight
    w_b = xavier_uniform(k_b, OUT_F, IN_F)   # Op_Selector b

    out = os_nand(x, w_a, w_b)
    out = jax.block_until_ready(out)

    # same post-condition as the torch module
    check_binary(out, "nand")

    # pure-JAX reference (mirrors the torch forward exactly)
    def ref_mask(w):
        idx = jnp.argmax(jax.nn.softmax(w, axis=1), axis=1)
        return jax.nn.one_hot(idx, w.shape[1], dtype=jnp.float32)

    ref = (x @ ref_mask(w_a).T) * (x @ ref_mask(w_b).T)
    assert out.shape == ref.shape, "shape mismatch vs reference"
    assert jnp.allclose(out, ref), "mismatch vs reference"

    print("KERNEL_OK")
</pallas_src>

<mosaic_0001>
module attributes {stable_mosaic.version = 11 : i64} {
  func.func @os_nand_kernel(%arg0: i32, %arg1: memref<8x32xbf16, #tpu.memory_space<vmem>>, %arg2: memref<256x32xbf16, #tpu.memory_space<vmem>>, %arg3: memref<8x128xf32, #tpu.memory_space<vmem>>) attributes {dimension_semantics = [#tpu.dimension_semantics<parallel>], iteration_bounds = array<i64: 1>, scalar_prefetch = 0 : i64, scratch_operands = 0 : i64, tpu.core_type = #tpu.core_type<tc>, window_params = [{transform_indices = @transform_0, window_bounds = array<i64: 8, 32>}, {pipeline_mode = #tpu.pipeline_mode<synchronous>, transform_indices = @transform_1, window_bounds = array<i64: 256, 32>}, {transform_indices = @transform_2, window_bounds = array<i64: 8, 128>}]} {
    %c0 = arith.constant 0 : index
    %c0_0 = arith.constant 0 : index
    %0 = vector.load %arg1[%c0, %c0_0] : memref<8x32xbf16, #tpu.memory_space<vmem>>, vector<8x32xbf16>
    %c0_1 = arith.constant 0 : index
    %c0_2 = arith.constant 0 : index
    %1 = vector.load %arg2[%c0_1, %c0_2] : memref<256x32xbf16, #tpu.memory_space<vmem>>, vector<256x32xbf16>
    %cst = arith.constant dense<0.000000e+00> : vector<8x256xf32>
    %2 = tpu.matmul %0, %1, %cst {dimension_numbers = #tpu.dot_dimension_numbers<[1], [1], [0], [0], [0, 0, 1, 0], [], []>} : vector<8x32xbf16>, vector<256x32xbf16>, vector<8x256xf32> -> vector<8x256xf32>
    %3 = vector.extract_strided_slice %2 {offsets = [0, 0], sizes = [8, 128], strides = [1, 1]} : vector<8x256xf32> to vector<8x128xf32>
    %4 = vector.extract_strided_slice %2 {offsets = [0, 128], sizes = [8, 128], strides = [1, 1]} : vector<8x256xf32> to vector<8x128xf32>
    %5 = arith.mulf %3, %4 : vector<8x128xf32>
    %c0_3 = arith.constant 0 : index
    %c0_4 = arith.constant 0 : index
    %6 = vector.load %arg3[%c0_3, %c0_4] : memref<8x128xf32, #tpu.memory_space<vmem>>, vector<8x128xf32>
    tpu.vector_store %arg3[%c0_3, %c0_4], %5 {strides = array<i32>} : memref<8x128xf32, #tpu.memory_space<vmem>>, vector<8x128xf32>,
    return
  }
  func.func @transform_0(%arg0: i32) -> (i32, i32) {
    %c0_i32 = arith.constant 0 : i32
    %c0_i32_0 = arith.constant 0 : i32
    return %arg0, %c0_i32 : i32, i32
  }
  func.func @transform_1(%arg0: i32) -> (i32, i32) {
    %c0_i32 = arith.constant 0 : i32
    %c0_i32_0 = arith.constant 0 : i32
    %c0_i32_1 = arith.constant 0 : i32
    return %c0_i32, %c0_i32_0 : i32, i32
  }
  func.func @transform_2(%arg0: i32) -> (i32, i32) {
    %c0_i32 = arith.constant 0 : i32
    %c0_i32_0 = arith.constant 0 : i32
    return %arg0, %c0_i32 : i32, i32
  }
}

</mosaic_0001>

<llo_original>
// kernel: tpu_custom_call.1
$region0: #{tpu_custom_call.1}
  #allocation0 [shape = 'u32[]', space=smem, size = 0x4, offset = 0x4, fixed_abs, tag = 'smem constant byte address 0x4 - core index']
  #allocation1 [shape = 'u32[72,128]{1,0:T(1,128)}', space=vmem, size = 0x9000, scoped, tag = 'internal scratch']
  %s0 = inlined_call_operand.vmem [shape: bf16[8,32], index: 0, kind: input, shape index: {}]
  %s1 = inlined_call_operand.vmem [shape: bf16[256,32], index: 1, kind: input, shape index: {}]
  %s2 = inlined_call_operand.hbm [shape: f32[8,128], index: 2, kind: output, shape index: {}]
  %s3 = sld [smem:[#allocation0]]
  $region18: #{tpu_custom_call.1} parent=0
    _
  %s5 = ssub.s32 1, %s3
  %s6 = scalar_select 0, %s5, %s3
  $region1: #{tpu_custom_call.1} parent=0
    #allocation2 [shape = 'u8[4096]{0}', space=vmem, size = 0x1000, scoped, tag = 'output window, operand 0, single buffered']
    #allocation3 [shape = 's32[1]{0}', space=sflag, size = 0x4, scoped, tag = 'scoped memory for tpu_custom_call.1']
    %7 = vsyncpa [#allocation3], 0
    // Predicated region
    $region2: #{tpu_custom_call.1} parent=1 // pred_check
      _
    $region3: #{tpu_custom_call.1} parent=1 // pred_check_branch
      %9 = sbr.rel (0) target = $region5
    $region4: #{tpu_custom_call.1} parent=1 // pred_region
      _
    $region5: #{tpu_custom_call.1} parent=1 // pred_fallthru
      _
    // Predicated region
    $region6: #{tpu_custom_call.1} parent=1 // pred_check
      _
    $region7: #{tpu_custom_call.1} parent=1 // pred_check_branch
      %11 = sbr.rel (0) target = $region9
    $region8: #{tpu_custom_call.1} parent=1 // pred_region
      _
    $region9: #{tpu_custom_call.1} parent=1 // pred_fallthru
      _
    %v12 = vld [vmem:[%s0] sm:$0xf]
    %v13 = vld [vmem:[%s1] sm:$0xf]
    %v14 = vld [vmem:[%s1 + $0x4] sm:$0xf]
    %v15 = vld [vmem:[%s1 + $0x8] sm:$0xf]
    %v16 = vld [vmem:[%s1 + $0xc] sm:$0xf]
    %v17 = vld [vmem:[%s1 + $0x10] sm:$0xf]
    %v18 = vld [vmem:[%s1 + $0x14] sm:$0xf]
    %v19 = vld [vmem:[%s1 + $0x18] sm:$0xf]
    %v20 = vld [vmem:[%s1 + $0x1c] sm:$0xf]
    %v21 = vld [vmem:[%s1 + $0x20] sm:$0xf]
    %v22 = vld [vmem:[%s1 + $0x24] sm:$0xf]
    %v23 = vld [vmem:[%s1 + $0x28] sm:$0xf]
    %v24 = vld [vmem:[%s1 + $0x2c] sm:$0xf]
    %v25 = vld [vmem:[%s1 + $0x30] sm:$0xf]
    %v26 = vld [vmem:[%s1 + $0x34] sm:$0xf]
    %v27 = vld [vmem:[%s1 + $0x38] sm:$0xf]
    %v28 = vld [vmem:[%s1 + $0x3c] sm:$0xf]
    %v29 = vld [vmem:[%s1 + $0x40] sm:$0xf]
    %v30 = vld [vmem:[%s1 + $0x44] sm:$0xf]
    %v31 = vld [vmem:[%s1 + $0x48] sm:$0xf]
    %v32 = vld [vmem:[%s1 + $0x4c] sm:$0xf]
    %v33 = vld [vmem:[%s1 + $0x50] sm:$0xf]
    %v34 = vld [vmem:[%s1 + $0x54] sm:$0xf]
    %v35 = vld [vmem:[%s1 + $0x58] sm:$0xf]
    %v36 = vld [vmem:[%s1 + $0x5c] sm:$0xf]
    %v37 = vld [vmem:[%s1 + $0x60] sm:$0xf]
    %v38 = vld [vmem:[%s1 + $0x64] sm:$0xf]
    %v39 = vld [vmem:[%s1 + $0x68] sm:$0xf]
    %v40 = vld [vmem:[%s1 + $0x6c] sm:$0xf]
    %v41 = vld [vmem:[%s1 + $0x70] sm:$0xf]
    %v42 = vld [vmem:[%s1 + $0x74] sm:$0xf]
    %v43 = vld [vmem:[%s1 + $0x78] sm:$0xf]
    %v44 = vld [vmem:[%s1 + $0x7c] sm:$0xf]
    %v77 = vunpack.c.l.b16 %v13
    %v78 = vunpack.c.l.b16 %v14
    %v79 = vunpack.c.l.b16 %v15
    %v80 = vunpack.c.l.b16 %v16
    %v81 = vunpack.c.l.b16 %v17
    %v82 = vunpack.c.l.b16 %v18
    %v83 = vunpack.c.l.b16 %v19
    %v84 = vunpack.c.l.b16 %v20
    %v85 = vunpack.c.l.b16 %v21
    %v86 = vunpack.c.l.b16 %v22
    %v87 = vunpack.c.l.b16 %v23
    %v88 = vunpack.c.l.b16 %v24
    %v89 = vunpack.c.l.b16 %v25
    %v90 = vunpack.c.l.b16 %v26
    %v91 = vunpack.c.l.b16 %v27
    %v92 = vunpack.c.l.b16 %v28
    %v93 = vunpack.c.l.b16 %v29
    %v94 = vunpack.c.l.b16 %v30
    %v95 = vunpack.c.l.b16 %v31
    %v96 = vunpack.c.l.b16 %v32
    %v97 = vunpack.c.l.b16 %v33
    %v98 = vunpack.c.l.b16 %v34
    %v99 = vunpack.c.l.b16 %v35
    %v100 = vunpack.c.l.b16 %v36
    %v101 = vunpack.c.l.b16 %v37
    %v102 = vunpack.c.l.b16 %v38
    %v103 = vunpack.c.l.b16 %v39
    %v104 = vunpack.c.l.b16 %v40
    %v105 = vunpack.c.l.b16 %v41
    %v106 = vunpack.c.l.b16 %v42
    %v107 = vunpack.c.l.b16 %v43
    %v108 = vunpack.c.l.b16 %v44
    %v109 = vpack.c.b16 %v78, %v77
    %v110 = vpack.c.b16 %v80, %v79
    %v111 = vpack.c.b16 %v82, %v81
    %v112 = vpack.c.b16 %v84, %v83
    %v113 = vpack.c.b16 %v86, %v85
    %v114 = vpack.c.b16 %v88, %v87
    %v115 = vpack.c.b16 %v90, %v89
    %v116 = vpack.c.b16 %v92, %v91
    %v117 = vpack.c.b16 %v94, %v93
    %v118 = vpack.c.b16 %v96, %v95
    %v119 = vpack.c.b16 %v98, %v97
    %v120 = vpack.c.b16 %v100, %v99
    %v121 = vpack.c.b16 %v102, %v101
    %v122 = vpack.c.b16 %v104, %v103
    %v123 = vpack.c.b16 %v106, %v105
    %v124 = vpack.c.b16 %v108, %v107
    %vm125 = vcmask 261120
    %v127 = vsel %vm125, %v12, 0
    %v130 = vsel %vm125, %v109, 0
    %v133 = vsel %vm125, %v110, 0
    %v136 = vsel %vm125, %v111, 0
    %v139 = vsel %vm125, %v112, 0
    %v142 = vsel %vm125, %v113, 0
    %v145 = vsel %vm125, %v114, 0
    %v148 = vsel %vm125, %v115, 0
    %v151 = vsel %vm125, %v116, 0
    %v154 = vsel %vm125, %v117, 0
    %v157 = vsel %vm125, %v118, 0
    %v160 = vsel %vm125, %v119, 0
    %v163 = vsel %vm125, %v120, 0
    %v166 = vsel %vm125, %v121, 0
    %v169 = vsel %vm125, %v122, 0
    %v172 = vsel %vm125, %v123, 0
    %v175 = vsel %vm125, %v124, 0
    %177 = vmatpush.bf16.xpose.msra.mxu0 %v151
    %178 = vmatpush.bf16.xpose.msra.mxu0 %v148
    %179 = vmatpush.bf16.xpose.msra.mxu0 %v145
    %180 = vmatpush.bf16.xpose.msra.mxu0 %v142
    %181 = vmatpush.bf16.xpose.msra.mxu0 %v139
    %182 = vmatpush.bf16.xpose.msra.mxu0 %v136
    %183 = vmatpush.bf16.xpose.msra.mxu0 %v133
    %184 = vmatpush.bf16.xpose.msra.mxu0 %v130
    %185 = vmatmul.bf16.gmra.mxu0 %v127
    %v186 = vpop.f32.mrf.mxu0
    %v187 = vadd.f32 0.0, %v186
    %v188 = vpop.f32.mrf.mxu0
    %189 = vdwg.mxu0
    %190 = vmatpush.bf16.xpose.msra.mxu0 %v175
    %191 = vmatpush.bf16.xpose.msra.mxu0 %v172
    %192 = vmatpush.bf16.xpose.msra.mxu0 %v169
    %193 = vmatpush.bf16.xpose.msra.mxu0 %v166
    %194 = vmatpush.bf16.xpose.msra.mxu0 %v163
    %195 = vmatpush.bf16.xpose.msra.mxu0 %v160
    %196 = vmatpush.bf16.xpose.msra.mxu0 %v157
    %197 = vmatpush.bf16.xpose.msra.mxu0 %v154
    %198 = vmatmul.bf16.gmra.mxu0 %v127
    %v199 = vpop.f32.mrf.mxu0
    %v200 = vadd.f32 0.0, %v199
    %v201 = vpop.f32.mrf.mxu0
    %202 = vdwg.mxu0
    %v203 = vmul.f32 %v187, %v200
    %204 = vst [vmem:[#allocation2] sm:$0xff] %v203
    // Predicated region
    $region10: #{tpu_custom_call.1} parent=1 // pred_check
      _
    $region11: #{tpu_custom_call.1} parent=1 // pred_check_branch
      %206 = sbr.rel (0) target = $region13
    $region12: #{tpu_custom_call.1} parent=1 // pred_region
      %208 = vsyncadd [#allocation3], 0
      %s210 = sshll.u32 [#allocation2], 4
      %s211 = int_to_ptr.vmem [resolvable:$true] %s210
      %s212 = sshll.u32 %s2, 4
      %s213 = int_to_ptr.hbm [resolvable:$true] %s212
      %215 = dma.vmem_to_hbm [thread:$0]  %s211, 128, %s213, [#allocation3]
    $region13: #{tpu_custom_call.1} parent=1 // pred_fallthru
      _
    // Predicated region
    $region14: #{tpu_custom_call.1} parent=1 // pred_check
      _
    $region15: #{tpu_custom_call.1} parent=1 // pred_check_branch
      %217 = sbr.rel (0) target = $region17
    $region16: #{tpu_custom_call.1} parent=1 // pred_region
      %219 = dma.done [#allocation3], 128
    $region17: #{tpu_custom_call.1} parent=1 // pred_fallthru
      _
    %220 = vsyncpa [#allocation3], 1

</llo_original>
